<compile_context>
chip_gen: v7x
topology: tpu7x:2x2x1
jax: 0.10.0
libtpu: 0.0.40
codegen_flags: <defaults>
</compile_context>

<pallas_src>
import functools

import jax
import jax.numpy as jnp
from jax.experimental import pallas as pl
from jax.experimental.pallas import tpu as pltpu


# ----------------------------------------------------------------------------
# Kernel 1: layer 0, K-tiled propagate + epilogue.
#   acc   += A[i,k] @ X[k]                 (int8 A dequantized to bf16, f32 acc)
#   at k==last:
#   h[i]   = relu( acc @ (s*W0_init) + X[i] @ W0_root + b0 )      -> bf16
# ----------------------------------------------------------------------------
def arma_stage1_kernel(a_ref, xk_ref, xr_ref, w0i_ref, w0r_ref, b0_ref,
                       h_ref, acc_ref):
    k = pl.program_id(1)

    @pl.when(k == 0)
    def _():
        acc_ref[...] = jnp.zeros_like(acc_ref)

    acc_ref[...] += jnp.dot(a_ref[...].astype(jnp.bfloat16), xk_ref[...],
                            preferred_element_type=jnp.float32)

    @pl.when(k == pl.num_programs(1) - 1)
    def _():
        ax = acc_ref[...].astype(jnp.bfloat16)      # dequant scale folded in W0_init
        h = jnp.dot(ax, w0i_ref[...], preferred_element_type=jnp.float32)
        h = h + jnp.dot(xr_ref[...], w0r_ref[...],
                        preferred_element_type=jnp.float32)
        h = h + b0_ref[...]
        # ARMAConv act=ReLU; the outer functional.relu is idempotent.
        h_ref[...] = jnp.maximum(h, 0.0).astype(h_ref.dtype)


# ----------------------------------------------------------------------------
# Kernel 2: layer 1, K-tiled propagate + epilogue + masked log_softmax.
#   acc   += A[i,k] @ h[k]
#   at k==last:
#   z[i]   = relu( acc @ (s*W1_init) + h[i] @ W1_root + b1 )
#   out[i] = log_softmax(z[i, :num_classes])  (padded class lanes masked)
# ----------------------------------------------------------------------------
def arma_stage2_kernel(a_ref, hk_ref, hr_ref, w1i_ref, w1r_ref, b1_ref,
                       o_ref, acc_ref, *, num_classes):
    k = pl.program_id(1)

    @pl.when(k == 0)
    def _():
        acc_ref[...] = jnp.zeros_like(acc_ref)

    acc_ref[...] += jnp.dot(a_ref[...].astype(jnp.bfloat16), hk_ref[...],
                            preferred_element_type=jnp.float32)

    @pl.when(k == pl.num_programs(1) - 1)
    def _():
        ah = acc_ref[...].astype(jnp.bfloat16)
        z = jnp.dot(ah, w1i_ref[...], preferred_element_type=jnp.float32)
        z = z + jnp.dot(hr_ref[...], w1r_ref[...],
                        preferred_element_type=jnp.float32)
        z = z + b1_ref[...]
        z = jnp.maximum(z, 0.0)   # ARMAConv default act=ReLU on the last layer too

        lane = jax.lax.broadcasted_iota(jnp.int32, z.shape, 1)
        z = jnp.where(lane < num_classes, z, -1e30)
        m = jnp.max(z, axis=-1, keepdims=True)
        e = jnp.exp(z - m)
        lse = jnp.log(jnp.sum(e, axis=-1, keepdims=True)) + m
        o_ref[...] = z - lse


# ----------------------------------------------------------------------------
# Wrapper: quantization / padding / dtype plumbing, tile selection, wiring.
# ----------------------------------------------------------------------------
def _round_up(x, m):
    return ((x + m - 1) // m) * m


def _pad2(m, rows, cols):
    return jnp.pad(m, ((0, rows - m.shape[0]), (0, cols - m.shape[1])))


def arma_forward(a_norm, x, params, *, tile_rows=None):
    """a_norm: [N, N] gcn-normalized dense adjacency, x: [N, F_in]."""
    n, f_in = x.shape
    hidden = params["w0_init"].shape[1]
    n_cls = params["w1_init"].shape[1]

    h_pad = _round_up(hidden, 128)
    c_pad = _round_up(n_cls, 128)

    # Tile selection: prefer 512-row tiles (85%+ of HBM roofline), but keep
    # >= 4 row tiles when N allows so each v7x TensorCore gets >= 2 pipeline
    # steps.  K-tiling bounds VMEM (~2 MiB/step) regardless of N.
    if tile_rows is None:
        tm = 512
        n128 = _round_up(n, 128)
        while tm > 128 and n128 < 4 * tm:
            tm //= 2
    else:
        tm = tile_rows
    tk = tm
    n_pad = _round_up(n, tm)
    gm, gk = n_pad // tm, n_pad // tk

    f32, bf16 = jnp.float32, jnp.bfloat16

    # --- int8 quantized adjacency (HBM storage format; MXU sees bf16) ---
    a_f = _pad2(a_norm.astype(f32), n_pad, n_pad)
    a_absmax = jnp.max(jnp.abs(a_f))
    a_scale = jnp.maximum(a_absmax, 1e-12) / 127.0
    a_q = jnp.clip(jnp.round(a_f / a_scale), -127.0, 127.0).astype(jnp.int8)

    x_bf = _pad2(x.astype(f32), n_pad, f_in).astype(bf16)

    # Dequant scale folded into the *_init weights (only the propagated term
    # was scaled by 1/a_scale), so the kernel never touches the scale.
    w0i = _pad2(params["w0_init"].astype(f32) * a_scale, f_in, h_pad).astype(bf16)
    w0r = _pad2(params["w0_root"].astype(f32), f_in, h_pad).astype(bf16)
    b0 = _pad2(params["b0"].astype(f32), 1, h_pad)
    w1i = _pad2(params["w1_init"].astype(f32) * a_scale, h_pad, c_pad).astype(bf16)
    w1r = _pad2(params["w1_root"].astype(f32), h_pad, c_pad).astype(bf16)
    b1 = _pad2(params["b1"].astype(f32), 1, c_pad)

    grid = (gm, gk)
    cparams = pltpu.CompilerParams(
        dimension_semantics=("parallel", "arbitrary"))

    a_spec = pl.BlockSpec((tm, tk), lambda i, k: (i, k))
    row = lambda cols: pl.BlockSpec((tm, cols), lambda i, k: (i, 0))
    kcol = lambda cols: pl.BlockSpec((tk, cols), lambda i, k: (k, 0))
    full = lambda rows, cols: pl.BlockSpec((rows, cols), lambda i, k: (0, 0))

    # ---- stage 1: layer 0 -> h (bf16) ----
    h = pl.pallas_call(
        arma_stage1_kernel,
        out_shape=jax.ShapeDtypeStruct((n_pad, h_pad), bf16),
        grid=grid,
        in_specs=[
            a_spec,              # A tile (int8)
            kcol(f_in),          # X contraction block (bf16)
            row(f_in),           # X row tile for the root term (bf16)
            full(f_in, h_pad),   # s * W0_init (bf16)
            full(f_in, h_pad),   # W0_root (bf16)
            full(1, h_pad),      # b0 (f32)
        ],
        out_specs=row(h_pad),
        scratch_shapes=[pltpu.VMEM((tm, f_in), f32)],
        compiler_params=cparams,
    )(a_q, x_bf, x_bf, w0i, w0r, b0)

    # ---- stage 2: layer 1 + log_softmax ----
    out_pad = pl.pallas_call(
        functools.partial(arma_stage2_kernel, num_classes=n_cls),
        out_shape=jax.ShapeDtypeStruct((n_pad, c_pad), f32),
        grid=grid,
        in_specs=[
            a_spec,              # A tile (int8)
            kcol(h_pad),         # h contraction block (bf16)
            row(h_pad),          # h row tile for the root term (bf16)
            full(h_pad, c_pad),  # s * W1_init (bf16)
            full(h_pad, c_pad),  # W1_root (bf16)
            full(1, c_pad),      # b1 (f32)
        ],
        out_specs=row(c_pad),
        scratch_shapes=[pltpu.VMEM((tm, h_pad), f32)],
        compiler_params=cparams,
    )(a_q, h, h, w1i, w1r, b1)

    return out_pad[:n, :n_cls]


# ----------------------------------------------------------------------------
# Plain-JAX glue: gcn_norm (add_self_loops=False) -> dense normalized adjacency
# ----------------------------------------------------------------------------
def dense_gcn_norm(edge_index, num_nodes):
    src, dst = edge_index[0], edge_index[1]
    ew = jnp.ones(src.shape[0], dtype=jnp.float32)
    deg = jnp.zeros((num_nodes,), jnp.float32).at[dst].add(ew)
    dinv = jnp.where(deg > 0, 1.0 / jnp.sqrt(deg), 0.0)
    norm = dinv[src] * ew * dinv[dst]
    # message flows src -> dst, aggregated at dst:  out = A @ x  with A[dst, src]
    a = jnp.zeros((num_nodes, num_nodes), jnp.float32).at[dst, src].add(norm)
    return a


def arma_reference(a, x, params):
    """Pure-JAX f32 reference of the same forward pass."""
    h = jnp.maximum(a @ (x @ params["w0_init"]) + x @ params["w0_root"]
                    + params["b0"], 0.0)
    z = jnp.maximum(a @ (h @ params["w1_init"]) + h @ params["w1_root"]
                    + params["b1"], 0.0)
    return jax.nn.log_softmax(z, axis=1)


def glorot(key, shape):
    fan_in, fan_out = shape[-2], shape[-1]
    limit = jnp.sqrt(6.0 / (fan_in + fan_out))
    return jax.random.uniform(key, shape, jnp.float32, -limit, limit)


if __name__ == "__main__":
    # Small shapes consistent with the module: N nodes, num_features -> hidden
    # -> num_classes.
    N, F_IN, HIDDEN, N_CLS = 256, 32, 64, 8

    key = jax.random.PRNGKey(0)
    kx, k0, k1, k2, k3 = jax.random.split(key, 5)

    # Node features
    x = jax.random.normal(kx, (N, F_IN), jnp.float32)

    # Deterministic bidirectional ring graph: edge_index [2, 2N]
    idx = jnp.arange(N)
    src = jnp.concatenate([idx, (idx + 1) % N])
    dst = jnp.concatenate([(idx + 1) % N, idx])
    edge_index = jnp.stack([src, dst], axis=0)

    a_norm = dense_gcn_norm(edge_index, N)

    # Deterministic parameter init (glorot weights, zero bias), mirrors
    # ARMAConv(K=1, T=1, shared_weights=False): init_weight, root_weight, bias.
    params = {
        "w0_init": glorot(k0, (F_IN, HIDDEN)),
        "w0_root": glorot(k1, (F_IN, HIDDEN)),
        "b0": jnp.zeros((1, HIDDEN), jnp.float32),
        "w1_init": glorot(k2, (HIDDEN, N_CLS)),
        "w1_root": glorot(k3, (HIDDEN, N_CLS)),
        "b1": jnp.zeros((1, N_CLS), jnp.float32),
    }

    out = arma_forward(a_norm, x, params)
    out = jax.block_until_ready(out)

    # Sanity 1: shape + log_softmax rows sum to 1 in prob space.
    assert out.shape == (N, N_CLS)
    row_sums = jnp.sum(jnp.exp(out), axis=1)
    assert jnp.allclose(row_sums, 1.0, atol=1e-3), row_sums

    # Sanity 2: matches the pure-JAX f32 reference (loose tol: bf16/int8 propagate).
    ref = arma_reference(a_norm, x, params)
    max_err = jnp.max(jnp.abs(out - ref))
    assert max_err < 7.5e-2, max_err

    print("KERNEL_OK")
</pallas_src>

<mosaic_0001>
module attributes {stable_mosaic.version = 11 : i64} {
  func.func @arma_stage1_kernel(%arg0: i32, %arg1: i32, %arg2: memref<128x128xi8, #tpu.memory_space<vmem>>, %arg3: memref<128x32xbf16, #tpu.memory_space<vmem>>, %arg4: memref<128x32xbf16, #tpu.memory_space<vmem>>, %arg5: memref<32x128xbf16, #tpu.memory_space<vmem>>, %arg6: memref<32x128xbf16, #tpu.memory_space<vmem>>, %arg7: memref<1x128xf32, #tpu.memory_space<vmem>>, %arg8: memref<128x128xbf16, #tpu.memory_space<vmem>>, %arg9: memref<128x32xf32, #tpu.memory_space<vmem>>) attributes {dimension_semantics = [#tpu.dimension_semantics<parallel>, #tpu.dimension_semantics<arbitrary>], iteration_bounds = array<i64: 2, 2>, scalar_prefetch = 0 : i64, scratch_operands = 1 : i64, tpu.core_type = #tpu.core_type<tc>, window_params = [{transform_indices = @transform_0, window_bounds = array<i64: 128, 128>}, {transform_indices = @transform_1, window_bounds = array<i64: 128, 32>}, {transform_indices = @transform_2, window_bounds = array<i64: 128, 32>}, {pipeline_mode = #tpu.pipeline_mode<synchronous>, transform_indices = @transform_3, window_bounds = array<i64: 32, 128>}, {pipeline_mode = #tpu.pipeline_mode<synchronous>, transform_indices = @transform_4, window_bounds = array<i64: 32, 128>}, {pipeline_mode = #tpu.pipeline_mode<synchronous>, transform_indices = @transform_5, window_bounds = array<i64: 1, 128>}, {transform_indices = @transform_6, window_bounds = array<i64: 128, 128>}]} {
    %c0_i32 = arith.constant 0 : i32
    %0 = arith.cmpi eq, %arg1, %c0_i32 : i32
    %1 = arith.extui %0 : i1 to i32
    %c0_i32_0 = arith.constant 0 : i32
    %2 = arith.cmpi ne, %1, %c0_i32_0 : i32
    scf.if %2 {
      %cst_9 = arith.constant 0.000000e+00 : f32
      %13 = vector.broadcast %cst_9 : f32 to vector<128x32xf32>
      %c0_10 = arith.constant 0 : index
      %c0_11 = arith.constant 0 : index
      %14 = vector.load %arg9[%c0_10, %c0_11] : memref<128x32xf32, #tpu.memory_space<vmem>>, vector<128x32xf32>
      tpu.vector_store %arg9[%c0_10, %c0_11], %13 {strides = array<i32>} : memref<128x32xf32, #tpu.memory_space<vmem>>, vector<128x32xf32>,
    } else {
    }
    %c0 = arith.constant 0 : index
    %c0_1 = arith.constant 0 : index
    %3 = vector.load %arg9[%c0, %c0_1] : memref<128x32xf32, #tpu.memory_space<vmem>>, vector<128x32xf32>
    %c0_2 = arith.constant 0 : index
    %c0_3 = arith.constant 0 : index
    %4 = vector.load %arg2[%c0_2, %c0_3] : memref<128x128xi8, #tpu.memory_space<vmem>>, vector<128x128xi8>
    %5 = arith.sitofp %4 : vector<128x128xi8> to vector<128x128xbf16>
    %c0_4 = arith.constant 0 : index
    %c0_5 = arith.constant 0 : index
    %6 = vector.load %arg3[%c0_4, %c0_5] : memref<128x32xbf16, #tpu.memory_space<vmem>>, vector<128x32xbf16>
    %cst = arith.constant dense<0.000000e+00> : vector<128x32xf32>
    %7 = tpu.matmul %5, %6, %cst {dimension_numbers = #tpu.dot_dimension_numbers<[1], [0], [0], [1], [0, 0, 1, 1], [], []>} : vector<128x128xbf16>, vector<128x32xbf16>, vector<128x32xf32> -> vector<128x32xf32>
    %8 = arith.addf %3, %7 : vector<128x32xf32>
    %c0_6 = arith.constant 0 : index
    %c0_7 = arith.constant 0 : index
    %9 = vector.load %arg9[%c0_6, %c0_7] : memref<128x32xf32, #tpu.memory_space<vmem>>, vector<128x32xf32>
    tpu.vector_store %arg9[%c0_6, %c0_7], %8 {strides = array<i32>} : memref<128x32xf32, #tpu.memory_space<vmem>>, vector<128x32xf32>,
    %c1_i32 = arith.constant 1 : i32
    %10 = arith.cmpi eq, %arg1, %c1_i32 : i32
    %11 = arith.extui %10 : i1 to i32
    %c0_i32_8 = arith.constant 0 : i32
    %12 = arith.cmpi ne, %11, %c0_i32_8 : i32
    scf.if %12 {
      %c0_9 = arith.constant 0 : index
      %c0_10 = arith.constant 0 : index
      %13 = vector.load %arg9[%c0_9, %c0_10] : memref<128x32xf32, #tpu.memory_space<vmem>>, vector<128x32xf32>
      %14 = arith.truncf %13 : vector<128x32xf32> to vector<128x32xbf16>
      %c0_11 = arith.constant 0 : index
      %c0_12 = arith.constant 0 : index
      %15 = vector.load %arg5[%c0_11, %c0_12] : memref<32x128xbf16, #tpu.memory_space<vmem>>, vector<32x128xbf16>
      %cst_13 = arith.constant dense<0.000000e+00> : vector<128x128xf32>
      %16 = tpu.matmul %14, %15, %cst_13 {dimension_numbers = #tpu.dot_dimension_numbers<[1], [0], [0], [1], [0, 0, 1, 1], [], []>} : vector<128x32xbf16>, vector<32x128xbf16>, vector<128x128xf32> -> vector<128x128xf32>
      %c0_14 = arith.constant 0 : index
      %c0_15 = arith.constant 0 : index
      %17 = vector.load %arg4[%c0_14, %c0_15] : memref<128x32xbf16, #tpu.memory_space<vmem>>, vector<128x32xbf16>
      %c0_16 = arith.constant 0 : index
      %c0_17 = arith.constant 0 : index
      %18 = vector.load %arg6[%c0_16, %c0_17] : memref<32x128xbf16, #tpu.memory_space<vmem>>, vector<32x128xbf16>
      %cst_18 = arith.constant dense<0.000000e+00> : vector<128x128xf32>
      %19 = tpu.matmul %17, %18, %cst_18 {dimension_numbers = #tpu.dot_dimension_numbers<[1], [0], [0], [1], [0, 0, 1, 1], [], []>} : vector<128x32xbf16>, vector<32x128xbf16>, vector<128x128xf32> -> vector<128x128xf32>
      %20 = arith.addf %16, %19 : vector<128x128xf32>
      %c0_19 = arith.constant 0 : index
      %c0_20 = arith.constant 0 : index
      %21 = vector.load %arg7[%c0_19, %c0_20] : memref<1x128xf32, #tpu.memory_space<vmem>>, vector<1x128xf32>
      %22 = vector.broadcast %21 : vector<1x128xf32> to vector<128x128xf32>
      %23 = arith.addf %20, %22 : vector<128x128xf32>
      %cst_21 = arith.constant 0.000000e+00 : f32
      %24 = vector.broadcast %cst_21 : f32 to vector<128x128xf32>
      %25 = arith.maximumf %23, %24 : vector<128x128xf32>
      %26 = arith.truncf %25 : vector<128x128xf32> to vector<128x128xbf16>
      %c0_22 = arith.constant 0 : index
      %c0_23 = arith.constant 0 : index
      %27 = vector.load %arg8[%c0_22, %c0_23] : memref<128x128xbf16, #tpu.memory_space<vmem>>, vector<128x128xbf16>
      tpu.vector_store %arg8[%c0_22, %c0_23], %26 {strides = array<i32>} : memref<128x128xbf16, #tpu.memory_space<vmem>>, vector<128x128xbf16>,
    } else {
    }
    return
  }
  func.func @transform_0(%arg0: i32, %arg1: i32) -> (i32, i32) {
    %c0_i32 = arith.constant 0 : i32
    return %arg0, %arg1 : i32, i32
  }
  func.func @transform_1(%arg0: i32, %arg1: i32) -> (i32, i32) {
    %c0_i32 = arith.constant 0 : i32
    %c0_i32_0 = arith.constant 0 : i32
    return %arg1, %c0_i32 : i32, i32
  }
  func.func @transform_2(%arg0: i32, %arg1: i32) -> (i32, i32) {
    %c0_i32 = arith.constant 0 : i32
    %c0_i32_0 = arith.constant 0 : i32
    return %arg0, %c0_i32 : i32, i32
  }
  func.func @transform_3(%arg0: i32, %arg1: i32) -> (i32, i32) {
    %c0_i32 = arith.constant 0 : i32
    %c0_i32_0 = arith.constant 0 : i32
    %c0_i32_1 = arith.constant 0 : i32
    return %c0_i32, %c0_i32_0 : i32, i32
  }
  func.func @transform_4(%arg0: i32, %arg1: i32) -> (i32, i32) {
    %c0_i32 = arith.constant 0 : i32
    %c0_i32_0 = arith.constant 0 : i32
    %c0_i32_1 = arith.constant 0 : i32
    return %c0_i32, %c0_i32_0 : i32, i32
  }
  func.func @transform_5(%arg0: i32, %arg1: i32) -> (i32, i32) {
    %c0_i32 = arith.constant 0 : i32
    %c0_i32_0 = arith.constant 0 : i32
    %c0_i32_1 = arith.constant 0 : i32
    return %c0_i32, %c0_i32_0 : i32, i32
  }
  func.func @transform_6(%arg0: i32, %arg1: i32) -> (i32, i32) {
    %c0_i32 = arith.constant 0 : i32
    %c0_i32_0 = arith.constant 0 : i32
    return %arg0, %c0_i32 : i32, i32
  }
}

</mosaic_0001>

<llo_original>
// kernel: tpu_custom_call.1
$region0: #{tpu_custom_call.1}
  #allocation0 [shape = 'u32[]', space=smem, size = 0x4, offset = 0x4, fixed_abs, tag = 'smem constant byte address 0x4 - core index']
  #allocation1 [shape = 'u32[144,128]{1,0:T(1,128)}', space=vmem, size = 0x12000, scoped, tag = 'internal scratch']
  #allocation2 [shape = 'f32[128,32]{1,0:T(8,128)}', space=vmem, size = 0x10000, scoped, tag = 'scratch operand']
  %s0 = inlined_call_operand.vmem [shape: s8[256,256], index: 0, kind: input, shape index: {}]
  %s1 = inlined_call_operand.vmem [shape: bf16[256,32], index: 1, kind: input, shape index: {}]
  %s2 = inlined_call_operand.vmem [shape: bf16[256,32], index: 2, kind: input, shape index: {}]
  %s3 = inlined_call_operand.vmem [shape: bf16[32,128], index: 3, kind: input, shape index: {}]
  %s4 = inlined_call_operand.vmem [shape: bf16[32,128], index: 4, kind: input, shape index: {}]
  %s5 = inlined_call_operand.vmem [shape: f32[1,128], index: 5, kind: input, shape index: {}]
  %s6 = inlined_call_operand.hbm [shape: bf16[256,128], index: 6, kind: output, shape index: {}]
  %s7 = sld [smem:[#allocation0]]
  $region103: #{tpu_custom_call.1} parent=0
    _
  %s9 = ssub.s32 1, %s7
  %s10 = scalar_select 0, %s9, %s7
  $region1: #{tpu_custom_call.1} parent=0
    #allocation3 [shape = 'u8[32768]{0}', space=vmem, size = 0x8000, scoped, tag = 'input window, operand 0']
    #allocation4 [shape = 'u8[65536]{0}', space=vmem, size = 0x10000, scoped, tag = 'output window, operand 0']
    #allocation5 [shape = 's32[2]{0}', space=sflag, size = 0x8, scoped, tag = 'scoped memory for tpu_custom_call.1']
    %11 = vsyncpa [#allocation5], 0
    %s12 = scalar_lea.sflag [#allocation5], 1
    %13 = vsyncpa %s12, 0
    loop: start=0, step=1, limit=6
    $region2: #{tpu_custom_call.1} parent=1 // loop_pre_header
      _
    $region3: #{tpu_custom_call.1} parent=1 // loop_header
      %s15 = sphi 0, %s19
      %p16 = scmp.ge.s32.totalorder %s15, 6
      %s22 = sphi 0, %s34
      %s23 = sphi 0, %s30
      %s24 = sphi 0, %s22
      %s25 = sphi 0, %s23
      %s26 = sphi 0, %s24
      %s27 = sphi 0, %s25
      %s39 = sphi 0, %s41
      %s42 = sphi 0, %s39
      %s43 = sphi 0, %s42
      %s59 = sphi 0, %s43
      %s65 = sphi 0, %s67
      %s68 = sphi 0, %s65
      %s69 = sphi 0, %s68
      %s85 = sphi 0, %s69
      %s91 = sphi 0, %s93
      %s94 = sphi 0, %s91
      %s95 = sphi 0, %s94
      %s111 = sphi 0, %s95
      %s115 = sphi 0, %s115
      %s117 = sphi 0, %s115
      %s118 = sphi 0, %s117
      %s132 = sphi 0, %s118
      %s136 = sphi 0, %s136
      %s138 = sphi 0, %s136
      %s139 = sphi 0, %s138
      %s153 = sphi 0, %s139
      %s157 = sphi 0, %s157
      %s159 = sphi 0, %s157
      %s160 = sphi 0, %s159
      %s174 = sphi 0, %s160
      %s180 = sphi 0, %s182
      %s183 = sphi 0, %s180
      %s184 = sphi 0, %s183
      %s200 = sphi 0, %s184
    $region4: #{tpu_custom_call.1} parent=1 // loop_header_branch
      %18 = sbr.rel (%p16) target = $region8
    $region5: #{tpu_custom_call.1} parent=1 // loop_body
      %s20 = ssub.s32 %s15, 1
      %s21 = ssub.s32 %s15, 2
      %s28 = sadd.s32 1, %s23
      %p29 = scmp.ge.s32.totalorder %s28, 2
      %s30 = scalar_select %p29, 0, %s28
      %s31 = sadd.s32 1, %s22
      %s32 = scalar_select %p29, %s31, %s22
      %p33 = scmp.ge.s32.totalorder %s32, 2
      %s34 = scalar_select %p33, 0, %s32
      %s35 = ssub.s32 %s22, %s34
      %s36 = ssub.s32 %s23, %s30
      %s37 = sor.u32 %s35, %s36
      %p38 = scmp.eq.s32.totalorder %s37, 0
      %s40 = sadd.s32 %s39, 1
      %s41 = scalar_select %p38, %s39, %s40
      %p44 = pneg %p38
      %p45 = scmp.eq.s32.totalorder %s15, 3
      %p46 = por %p44, %p45
      %p47 = scmp.ne.s32.totalorder %s39, %s42
      %p48 = scmp.eq.s32.totalorder %s15, 0
      %p49 = por %p47, %p48
      %p50 = scmp.ne.s32.totalorder %s39, %s42
      %p51 = scmp.eq.s32.totalorder %s20, 3
      %p52 = por %p50, %p51
      %p53 = scmp.ne.s32.totalorder %s42, %s43
      %p54 = scmp.eq.s32.totalorder %s20, 0
      %p55 = por %p53, %p54
      %p56 = scmp.ne.s32.totalorder %s42, %s43
      %p57 = scmp.eq.s32.totalorder %s21, 3
      %p58 = por %p56, %p57
      %p60 = scmp.ne.s32.totalorder %s43, %s59
      %p61 = scmp.eq.s32.totalorder %s21, 0
      %p62 = por %p60, %p61
      %s63 = ssub.s32 %s23, %s30
      %p64 = scmp.eq.s32.totalorder %s63, 0
      %s66 = sadd.s32 %s65, 1
      %s67 = scalar_select %p64, %s65, %s66
      %p70 = pneg %p64
      %p71 = scmp.eq.s32.totalorder %s15, 3
      %p72 = por %p70, %p71
      %p73 = scmp.ne.s32.totalorder %s65, %s68
      %p74 = scmp.eq.s32.totalorder %s15, 0
      %p75 = por %p73, %p74
      %p76 = scmp.ne.s32.totalorder %s65, %s68
      %p77 = scmp.eq.s32.totalorder %s20, 3
      %p78 = por %p76, %p77
      %p79 = scmp.ne.s32.totalorder %s68, %s69
      %p80 = scmp.eq.s32.totalorder %s20, 0
      %p81 = por %p79, %p80
      %p82 = scmp.ne.s32.totalorder %s68, %s69
      %p83 = scmp.eq.s32.totalorder %s21, 3
      %p84 = por %p82, %p83
      %p86 = scmp.ne.s32.totalorder %s69, %s85
      %p87 = scmp.eq.s32.totalorder %s21, 0
      %p88 = por %p86, %p87
      %s89 = ssub.s32 %s22, %s34
      %p90 = scmp.eq.s32.totalorder %s89, 0
      %s92 = sadd.s32 %s91, 1
      %s93 = scalar_select %p90, %s91, %s92
      %p96 = pneg %p90
      %p97 = scmp.eq.s32.totalorder %s15, 3
      %p98 = por %p96, %p97
      %p99 = scmp.ne.s32.totalorder %s91, %s94
      %p100 = scmp.eq.s32.totalorder %s15, 0
      %p101 = por %p99, %p100
      %p102 = scmp.ne.s32.totalorder %s91, %s94
      %p103 = scmp.eq.s32.totalorder %s20, 3
      %p104 = por %p102, %p103
      %p105 = scmp.ne.s32.totalorder %s94, %s95
      %p106 = scmp.eq.s32.totalorder %s20, 0
      %p107 = por %p105, %p106
      %p108 = scmp.ne.s32.totalorder %s94, %s95
      %p109 = scmp.eq.s32.totalorder %s21, 3
      %p110 = por %p108, %p109
      %p112 = scmp.ne.s32.totalorder %s95, %s111
      %p113 = scmp.eq.s32.totalorder %s21, 0
      %p114 = por %p112, %p113
      %s116 = sadd.s32 %s115, 1
      %p119 = scmp.eq.s32.totalorder %s15, 3
      %p120 = scmp.ne.s32.totalorder %s115, %s117
      %p121 = scmp.eq.s32.totalorder %s15, 0
      %p122 = por %p120, %p121
      %p123 = scmp.ne.s32.totalorder %s115, %s117
      %p124 = scmp.eq.s32.totalorder %s20, 3
      %p125 = por %p123, %p124
      %p126 = scmp.ne.s32.totalorder %s117, %s118
      %p127 = scmp.eq.s32.totalorder %s20, 0
      %p128 = por %p126, %p127
      %p129 = scmp.ne.s32.totalorder %s117, %s118
      %p130 = scmp.eq.s32.totalorder %s21, 3
      %p131 = por %p129, %p130
      %p133 = scmp.ne.s32.totalorder %s118, %s132
      %p134 = scmp.eq.s32.totalorder %s21, 0
      %p135 = por %p133, %p134
      %s137 = sadd.s32 %s136, 1
      %p140 = scmp.eq.s32.totalorder %s15, 3
      %p141 = scmp.ne.s32.totalorder %s136, %s138
      %p142 = scmp.eq.s32.totalorder %s15, 0
      %p143 = por %p141, %p142
      %p144 = scmp.ne.s32.totalorder %s136, %s138
      %p145 = scmp.eq.s32.totalorder %s20, 3
      %p146 = por %p144, %p145
      %p147 = scmp.ne.s32.totalorder %s138, %s139
      %p148 = scmp.eq.s32.totalorder %s20, 0
      %p149 = por %p147, %p148
      %p150 = scmp.ne.s32.totalorder %s138, %s139
      %p151 = scmp.eq.s32.totalorder %s21, 3
      %p152 = por %p150, %p151
      %p154 = scmp.ne.s32.totalorder %s139, %s153
      %p155 = scmp.eq.s32.totalorder %s21, 0
      %p156 = por %p154, %p155
      %s158 = sadd.s32 %s157, 1
      %p161 = scmp.eq.s32.totalorder %s15, 3
      %p162 = scmp.ne.s32.totalorder %s157, %s159
      %p163 = scmp.eq.s32.totalorder %s15, 0
      %p164 = por %p162, %p163
      %p165 = scmp.ne.s32.totalorder %s157, %s159
      %p166 = scmp.eq.s32.totalorder %s20, 3
      %p167 = por %p165, %p166
      %p168 = scmp.ne.s32.totalorder %s159, %s160
      %p169 = scmp.eq.s32.totalorder %s20, 0
      %p170 = por %p168, %p169
      %p171 = scmp.ne.s32.totalorder %s159, %s160
      %p172 = scmp.eq.s32.totalorder %s21, 3
      %p173 = por %p171, %p172
      %p175 = scmp.ne.s32.totalorder %s160, %s174
      %p176 = scmp.eq.s32.totalorder %s21, 0
      %p177 = por %p175, %p176
      %s178 = ssub.s32 %s22, %s34
      %p179 = scmp.eq.s32.totalorder %s178, 0
      %s181 = sadd.s32 %s180, 1
      %s182 = scalar_select %p179, %s180, %s181
      %p185 = pneg %p179
      %p186 = scmp.eq.s32.totalorder %s15, 3
      %p187 = por %p185, %p186
      %p188 = scmp.ne.s32.totalorder %s180, %s183
      %p189 = scmp.eq.s32.totalorder %s15, 0
      %p190 = por %p188, %p189
      %p191 = scmp.ne.s32.totalorder %s180, %s183
      %p192 = scmp.eq.s32.totalorder %s20, 3
      %p193 = por %p191, %p192
      %p194 = scmp.ne.s32.totalorder %s183, %s184
      %p195 = scmp.eq.s32.totalorder %s20, 0
      %p196 = por %p194, %p195
      %p197 = scmp.ne.s32.totalorder %s183, %s184
      %p198 = scmp.eq.s32.totalorder %s21, 3
      %p199 = por %p197, %p198
      %p201 = scmp.ne.s32.totalorder %s184, %s200
      %p202 = scmp.eq.s32.totalorder %s21, 0
      %p203 = por %p201, %p202
      %p204 = scmp.le.s32.totalorder 1, %s15
      %p205 = scmp.lt.s32.totalorder %s15, 5
      %p206 = pnand %p204, %p205
      %p207 = pneg %p206
      // Predicated region
      $region9: #{tpu_custom_call.1} parent=5 // pred_check
        _
      $region10: #{tpu_custom_call.1} parent=5 // pred_check_branch
        %209 = sbr.rel (%p206) target = $region12
      $region11: #{tpu_custom_call.1} parent=5 // pred_region
        %s210 = ssub.s32 %s15, 1
        // Predicated region
        $region13: #{tpu_custom_call.1} parent=11 // pred_check
          %p211 = pneg %p128
        $region14: #{tpu_custom_call.1} parent=11 // pred_check_branch
          %213 = sbr.rel (%p211) target = $region16
        $region15: #{tpu_custom_call.1} parent=11 // pred_region
          _
        $region16: #{tpu_custom_call.1} parent=11 // pred_fallthru
          _
        // Predicated region
        $region17: #{tpu_custom_call.1} parent=11 // pred_check
          %p214 = pneg %p149
        $region18: #{tpu_custom_call.1} parent=11 // pred_check_branch
          %216 = sbr.rel (%p214) target = $region20
        $region19: #{tpu_custom_call.1} parent=11 // pred_region
          _
        $region20: #{tpu_custom_call.1} parent=11 // pred_fallthru
          _
        // Predicated region
        $region21: #{tpu_custom_call.1} parent=11 // pred_check
          %p217 = pneg %p170
        $region22: #{tpu_custom_call.1} parent=11 // pred_check_branch
          %219 = sbr.rel (%p217) target = $region24
        $region23: #{tpu_custom_call.1} parent=11 // pred_region
          _
        $region24: #{tpu_custom_call.1} parent=11 // pred_fallthru
          _
      $region12: #{tpu_custom_call.1} parent=5 // pred_fallthru
        _
      %p220 = scmp.lt.s32.totalorder %s15, 4
      // Predicated region
      $region25: #{tpu_custom_call.1} parent=5 // pred_check
        %p221 = pneg %p220
      $region26: #{tpu_custom_call.1} parent=5 // pred_check_branch
        %223 = sbr.rel (%p221) target = $region28
      $region27: #{tpu_custom_call.1} parent=5 // pred_region
        // Predicated region
        $region29: #{tpu_custom_call.1} parent=27 // pred_check
          %p224 = pneg %p49
        $region30: #{tpu_custom_call.1} parent=27 // pred_check_branch
          %226 = sbr.rel (%p224) target = $region32
        $region31: #{tpu_custom_call.1} parent=27 // pred_region
          %s227 = sand.u32 %s39, 1
          %s228 = sand.u32 %s39, 1
          %s229 = smul.addr %s228, 32
          %s230 = scalar_lea.vmem [#allocation3], %s229
          %s231 = smul.u32 4, %s22
          %s232 = smul.addr %s231, 2
          %s233 = sadd.s32 %s23, %s232
          %s234 = smul.addr %s233, 8
          %s235 = scalar_lea.vmem %s0, %s234
          // Predicated region
          $region33: #{tpu_custom_call.1} parent=31 // pred_check
            _
          $region34: #{tpu_custom_call.1} parent=31 // pred_check_branch
            %237 = sbr.rel (0) target = $region36
          $region35: #{tpu_custom_call.1} parent=31 // pred_region
            // Predicated region
            $region37: #{tpu_custom_call.1} parent=35 // pred_check
              _
            $region38: #{tpu_custom_call.1} parent=35 // pred_check_branch
              %239 = sbr.rel (0) target = $region40
            $region39: #{tpu_custom_call.1} parent=35 // pred_region
              // Predicated region
              $region52: #{tpu_custom_call.1} parent=39 // pred_check
                _
              $region53: #{tpu_custom_call.1} parent=39 // pred_check_branch
                %260 = sbr.rel (0) target = $region55
              $region54: #{tpu_custom_call.1} parent=39 // pred_region
                loop: start=0, step=1, limit=1
                $region56: #{tpu_custom_call.1} parent=54 // loop_pre_header
                  _
                $region57: #{tpu_custom_call.1} parent=54 // loop_header
                  %s262 = sphi 0, %s266
                  %p263 = scmp.ge.s32.totalorder %s262, 1
                  %s267 = sphi %s235, %s235
                  %s268 = sphi %s230, %s230
                $region58: #{tpu_custom_call.1} parent=54 // loop_header_branch
                  %265 = sbr.rel (%p263) target = $region62
                $region59: #{tpu_custom_call.1} parent=54 // loop_body
                  %v269 = vld [vmem:[%s267] sm:$0xff]
                  %270 = vst [vmem:[%s268] sm:$0xff] %v269
                  %v271 = vld [vmem:[%s267 + $0x10] sm:$0xff]
                  %272 = vst [vmem:[%s268 + $0x8] sm:$0xff] %v271
                  %v273 = vld [vmem:[%s267 + $0x20] sm:$0xff]
                  %274 = vst [vmem:[%s268 + $0x10] sm:$0xff] %v273
                  %v275 = vld [vmem:[%s267 + $0x30] sm:$0xff]
                  %276 = vst [vmem:[%s268 + $0x18] sm:$0xff] %v275
                $region60: #{tpu_custom_call.1} parent=54 // loop_footer
                  %s266 = sadd.s32 1, %s262
                $region61: #{tpu_custom_call.1} parent=54 // loop_footer_branch
                  %261 = sbr.rel target = $region57
                $region62: #{tpu_custom_call.1} parent=54 // loop_exit
                  _
              $region55: #{tpu_custom_call.1} parent=39 // pred_fallthru
                _
              // Predicated region
              $region63: #{tpu_custom_call.1} parent=39 // pred_check
                _
              $region64: #{tpu_custom_call.1} parent=39 // pred_check_branch
                %278 = sbr.rel target = $region66
              $region65: #{tpu_custom_call.1} parent=39 // pred_region
                _
              $region66: #{tpu_custom_call.1} parent=39 // pred_fallthru
                _
            $region40: #{tpu_custom_call.1} parent=35 // pred_fallthru
              _
            // Predicated region
            $region41: #{tpu_custom_call.1} parent=35 // pred_check
              _
            $region42: #{tpu_custom_call.1} parent=35 // pred_check_branch
              %241 = sbr.rel target = $region44
            $region43: #{tpu_custom_call.1} parent=35 // pred_region
              loop: start=0, step=1, limit=1
              $region45: #{tpu_custom_call.1} parent=43 // loop_pre_header
                _
              $region46: #{tpu_custom_call.1} parent=43 // loop_header
                %s244 = sphi 0, %s248
                %p245 = scmp.ge.s32.totalorder %s244, 1
                %s249 = sphi %s235, %s235
                %s250 = sphi %s230, %s230
              $region47: #{tpu_custom_call.1} parent=43 // loop_header_branch
                %247 = sbr.rel (%p245) target = $region51
              $region48: #{tpu_custom_call.1} parent=43 // loop_body
                %v251 = vld [vmem:[%s249] sm:$0xff]
                %252 = vst [vmem:[%s250] sm:$0xff] %v251
                %v253 = vld [vmem:[%s249 + $0x10] sm:$0xff]
                %254 = vst [vmem:[%s250 + $0x8] sm:$0xff] %v253
                %v255 = vld [vmem:[%s249 + $0x20] sm:$0xff]
                %256 = vst [vmem:[%s250 + $0x10] sm:$0xff] %v255
                %v257 = vld [vmem:[%s249 + $0x30] sm:$0xff]
                %258 = vst [vmem:[%s250 + $0x18] sm:$0xff] %v257
              $region49: #{tpu_custom_call.1} parent=43 // loop_footer
                %s248 = sadd.s32 1, %s244
              $region50: #{tpu_custom_call.1} parent=43 // loop_footer_branch
                %243 = sbr.rel target = $region46
              $region51: #{tpu_custom_call.1} parent=43 // loop_exit
                _
            $region44: #{tpu_custom_call.1} parent=35 // pred_fallthru
              _
          $region36: #{tpu_custom_call.1} parent=31 // pred_fallthru
            _
          %279 = vnop
        $region32: #{tpu_custom_call.1} parent=27 // pred_fallthru
          _
        // Predicated region
        $region67: #{tpu_custom_call.1} parent=27 // pred_check
          %p280 = pneg %p75
        $region68: #{tpu_custom_call.1} parent=27 // pred_check_branch
          %282 = sbr.rel (%p280) target = $region70
        $region69: #{tpu_custom_call.1} parent=27 // pred_region
          %s283 = smul.u32 16, %s23
          %p284 = scmp.lt.s32.totalorder %s283, 31
          %s285 = scalar_select %p284, %s283, 31
          %s286 = smul.addr %s285, 4
          %s287 = scalar_lea.vmem %s1, %s286
          %s288 = smul.u32 16, %s23
        $region70: #{tpu_custom_call.1} parent=27 // pred_fallthru
          _
        // Predicated region
        $region71: #{tpu_custom_call.1} parent=27 // pred_check
          %p289 = pneg %p101
        $region72: #{tpu_custom_call.1} parent=27 // pred_check_branch
          %291 = sbr.rel (%p289) target = $region74
        $region73: #{tpu_custom_call.1} parent=27 // pred_region
          %s292 = smul.u32 16, %s22
          %p293 = scmp.lt.s32.totalorder %s292, 31
          %s294 = scalar_select %p293, %s292, 31
          %s295 = smul.addr %s294, 4
          %s296 = scalar_lea.vmem %s2, %s295
          %s297 = smul.u32 16, %s22
        $region74: #{tpu_custom_call.1} parent=27 // pred_fallthru
          _
      $region28: #{tpu_custom_call.1} parent=5 // pred_fallthru
        _
      %p298 = scmp.le.s32.totalorder 1, %s15
      %p299 = scmp.lt.s32.totalorder %s15, 5
      %p300 = pnand %p298, %p299
      %p301 = pneg %p300
      // Predicated region
      $region75: #{tpu_custom_call.1} parent=5 // pred_check
        _
      $region76: #{tpu_custom_call.1} parent=5 // pred_check_branch
        %303 = sbr.rel (%p300) target = $region78
      $region77: #{tpu_custom_call.1} parent=5 // pred_region
        %s304 = ssub.s32 %s15, 1
        %s305 = sand.u32 %s42, 1
        %s306 = sand.u32 %s42, 1
        %s307 = smul.addr %s306, 32
        %s308 = scalar_lea.vmem [#allocation3], %s307
        // Predicated region
        $region79: #{tpu_custom_call.1} parent=77 // pred_check
          %p309 = pneg %p55
        $region80: #{tpu_custom_call.1} parent=77 // pred_check_branch
          %311 = sbr.rel (%p309) target = $region82
        $region81: #{tpu_custom_call.1} parent=77 // pred_region
          _
        $region82: #{tpu_custom_call.1} parent=77 // pred_fallthru
          _
        %s312 = sand.u32 %s42, 1
        %s313 = sand.u32 %s42, 1
        %s314 = smul.addr %s313, 32
        %s315 = scalar_lea.vmem [#allocation3], %s314
        %p316 = pneg %p55
        %p317 = pneg %p52
        %s318 = smul.u32 16, %s25
        %p319 = scmp.lt.s32.totalorder %s318, 31
        %s320 = scalar_select %p319, %s318, 31
        %s321 = smul.addr %s320, 4
        %s322 = scalar_lea.vmem %s1, %s321
        %p323 = pneg %p81
        %p324 = pneg %p78
        %s325 = smul.u32 16, %s24
        %p326 = scmp.lt.s32.totalorder %s325, 31
        %s327 = scalar_select %p326, %s325, 31
        %s328 = smul.addr %s327, 4
        %s329 = scalar_lea.vmem %s2, %s328
        %p330 = pneg %p107
        %p331 = pneg %p104
        %p332 = pneg %p128
        %p333 = pneg %p125
        %p334 = pneg %p149
        %p335 = pneg %p146
        %p336 = pneg %p170
        %p337 = pneg %p167
        %p338 = pneg %p196
        %p339 = pneg %p193
        %s340 = sand.u32 %s183, 1
        %s341 = scalar_lea.sflag [#allocation5], %s340
        %s342 = sand.u32 %s183, 1
        %s343 = smul.addr %s342, 64
        %s344 = scalar_lea.vmem [#allocation4], %s343
        %s345 = smul.u32 4, %s24
        %s346 = smul.u32 16, %s25
        %p347 = scmp.lt.s32.totalorder %s346, 31
        %s348 = scalar_select %p347, %s346, 31
        %s349 = smul.addr %s348, 4
        %s350 = scalar_lea.vmem %s1, %s349
        %s351 = smul.u32 16, %s25
        %s352 = smul.u32 16, %s24
        %p353 = scmp.lt.s32.totalorder %s352, 31
        %s354 = scalar_select %p353, %s352, 31
        %s355 = smul.addr %s354, 4
        %s356 = scalar_lea.vmem %s2, %s355
        %s357 = smul.u32 16, %s24
        %s358 = smul.u32 16, %s24
        %p360 = scmp.eq.s32.totalorder %s25, 0
        // Predicated region
        $region83: #{tpu_custom_call.1} parent=77 // pred_check
          %p361 = pneg %p360
        $region84: #{tpu_custom_call.1} parent=77 // pred_check_branch
          %363 = sbr.rel (%p361) target = $region86
        $region85: #{tpu_custom_call.1} parent=77 // pred_region
          %vm364 = vcmask 261120
          %365 = vst.msk [vmem:[#allocation2] sm:$0xff] %vm364, 0.0
          %366 = vst.msk [vmem:[#allocation2 + $0x8] sm:$0xff] %vm364, 0.0
          %367 = vst.msk [vmem:[#allocation2 + $0x10] sm:$0xff] %vm364, 0.0
          %368 = vst.msk [vmem:[#allocation2 + $0x18] sm:$0xff] %vm364, 0.0
          %369 = vst.msk [vmem:[#allocation2 + $0x20] sm:$0xff] %vm364, 0.0
          %370 = vst.msk [vmem:[#allocation2 + $0x28] sm:$0xff] %vm364, 0.0
          %371 = vst.msk [vmem:[#allocation2 + $0x30] sm:$0xff] %vm364, 0.0
          %372 = vst.msk [vmem:[#allocation2 + $0x38] sm:$0xff] %vm364, 0.0
          %373 = vst.msk [vmem:[#allocation2 + $0x40] sm:$0xff] %vm364, 0.0
          %374 = vst.msk [vmem:[#allocation2 + $0x48] sm:$0xff] %vm364, 0.0
          %375 = vst.msk [vmem:[#allocation2 + $0x50] sm:$0xff] %vm364, 0.0
          %376 = vst.msk [vmem:[#allocation2 + $0x58] sm:$0xff] %vm364, 0.0
          %377 = vst.msk [vmem:[#allocation2 + $0x60] sm:$0xff] %vm364, 0.0
          %378 = vst.msk [vmem:[#allocation2 + $0x68] sm:$0xff] %vm364, 0.0
          %379 = vst.msk [vmem:[#allocation2 + $0x70] sm:$0xff] %vm364, 0.0
          %380 = vst.msk [vmem:[#allocation2 + $0x78] sm:$0xff] %vm364, 0.0
        $region86: #{tpu_custom_call.1} parent=77 // pred_fallthru
          _
        %v381 = vld [vmem:[#allocation2] sm:$0xff]
        %v382 = vld [vmem:[#allocation2 + $0x8] sm:$0xff]
        %v383 = vld [vmem:[#allocation2 + $0x10] sm:$0xff]
        %v384 = vld [vmem:[#allocation2 + $0x18] sm:$0xff]
        %v385 = vld [vmem:[#allocation2 + $0x20] sm:$0xff]
        %v386 = vld [vmem:[#allocation2 + $0x28] sm:$0xff]
        %v387 = vld [vmem:[#allocation2 + $0x30] sm:$0xff]
        %v388 = vld [vmem:[#allocation2 + $0x38] sm:$0xff]
        %v389 = vld [vmem:[#allocation2 + $0x40] sm:$0xff]
        %v390 = vld [vmem:[#allocation2 + $0x48] sm:$0xff]
        %v391 = vld [vmem:[#allocation2 + $0x50] sm:$0xff]
        %v392 = vld [vmem:[#allocation2 + $0x58] sm:$0xff]
        %v393 = vld [vmem:[#allocation2 + $0x60] sm:$0xff]
        %v394 = vld [vmem:[#allocation2 + $0x68] sm:$0xff]
        %v395 = vld [vmem:[#allocation2 + $0x70] sm:$0xff]
        %v396 = vld [vmem:[#allocation2 + $0x78] sm:$0xff]
        %v397 = vld [vmem:[%s308] sm:$0xff]
        %v398 = vld [vmem:[%s308 + $0x8] sm:$0xff]
        %v399 = vld [vmem:[%s308 + $0x10] sm:$0xff]
        %v400 = vld [vmem:[%s308 + $0x18] sm:$0xff]
        %v401 = vunpack.c.l.s8.bf16 %v397
        %v402 = vunpack.c.h.s8.bf16 %v397
        %v403 = vunpack.c.l.s8.bf16 %v398
        %v404 = vunpack.c.h.s8.bf16 %v398
        %v405 = vunpack.c.l.s8.bf16 %v399
        %v406 = vunpack.c.h.s8.bf16 %v399
        %v407 = vunpack.c.l.s8.bf16 %v400
        %v408 = vunpack.c.h.s8.bf16 %v400
        %v409 = vld [vmem:[%s350] sm:$0xf]
        %v410 = vld [vmem:[%s350 + $0x4] sm:$0xf]
        %v411 = vld [vmem:[%s350 + $0x8] sm:$0xf]
        %v412 = vld [vmem:[%s350 + $0xc] sm:$0xf]
        %v413 = vld [vmem:[%s350 + $0x10] sm:$0xf]
        %v414 = vld [vmem:[%s350 + $0x14] sm:$0xf]
        %v415 = vld [vmem:[%s350 + $0x18] sm:$0xf]
        %v416 = vld [vmem:[%s350 + $0x1c] sm:$0xf]
        %v417 = vld [vmem:[%s350 + $0x20] sm:$0xf]
        %v418 = vld [vmem:[%s350 + $0x24] sm:$0xf]
        %v419 = vld [vmem:[%s350 + $0x28] sm:$0xf]
        %v420 = vld [vmem:[%s350 + $0x2c] sm:$0xf]
        %v421 = vld [vmem:[%s350 + $0x30] sm:$0xf]
        %v422 = vld [vmem:[%s350 + $0x34] sm:$0xf]
        %v423 = vld [vmem:[%s350 + $0x38] sm:$0xf]
        %v424 = vld [vmem:[%s350 + $0x3c] sm:$0xf]
        %v441 = vunpack.c.l.b16 %v409
        %v442 = vunpack.c.l.b16 %v410
        %v443 = vunpack.c.l.b16 %v411
        %v444 = vunpack.c.l.b16 %v412
        %v445 = vunpack.c.l.b16 %v413
        %v446 = vunpack.c.l.b16 %v414
        %v447 = vunpack.c.l.b16 %v415
        %v448 = vunpack.c.l.b16 %v416
        %v449 = vunpack.c.l.b16 %v417
        %v450 = vunpack.c.l.b16 %v418
        %v451 = vunpack.c.l.b16 %v419
        %v452 = vunpack.c.l.b16 %v420
        %v453 = vunpack.c.l.b16 %v421
        %v454 = vunpack.c.l.b16 %v422
        %v455 = vunpack.c.l.b16 %v423
        %v456 = vunpack.c.l.b16 %v424
        %v457 = vpack.c.b16 %v442, %v441
        %v458 = vpack.c.b16 %v444, %v443
        %v459 = vpack.c.b16 %v446, %v445
        %v460 = vpack.c.b16 %v448, %v447
        %v461 = vpack.c.b16 %v450, %v449
        %v462 = vpack.c.b16 %v452, %v451
        %v463 = vpack.c.b16 %v454, %v453
        %v464 = vpack.c.b16 %v456, %v455
        %473 = vmatprep.subr.bf16.mxu0 0
        %474 = vmatpush1.bf16.msra.mxu0 %v457
        %475 = vmatprep.subr.bf16.mxu0 0
        %476 = vmatpush1.bf16.msra.mxu0 %v458
        %477 = vmatprep.subr.bf16.mxu0 0
        %478 = vmatpush1.bf16.msra.mxu0 %v459
        %479 = vmatprep.subr.bf16.mxu0 0
        %480 = vmatpush1.bf16.msra.mxu0 %v460
        %481 = vmatprep.subr.bf16.mxu0 0
        %482 = vmatpush1.bf16.msra.mxu0 %v461
        %483 = vmatprep.subr.bf16.mxu0 0
        %484 = vmatpush1.bf16.msra.mxu0 %v462
        %485 = vmatprep.subr.bf16.mxu0 0
        %486 = vmatpush1.bf16.msra.mxu0 %v463
        %487 = vmatprep.subr.bf16.mxu0 0
        %488 = vmatpush1.bf16.msra.mxu0 %v464
        %489 = vmatprep.subr.bf16.mxu0 0
        %490 = vmatpush1.bf16.msra.mxu0 0
        %491 = vmatprep.subr.bf16.mxu0 0
        %492 = vmatpush1.bf16.msra.mxu0 0
        %493 = vmatprep.subr.bf16.mxu0 0
        %494 = vmatpush1.bf16.msra.mxu0 0
        %495 = vmatprep.subr.bf16.mxu0 0
        %496 = vmatpush1.bf16.msra.mxu0 0
        %497 = vmatprep.subr.bf16.mxu0 0
        %498 = vmatpush1.bf16.msra.mxu0 0
        %499 = vmatprep.subr.bf16.mxu0 0
        %500 = vmatpush1.bf16.msra.mxu0 0
        %501 = vmatprep.subr.bf16.mxu0 0
        %502 = vmatpush1.bf16.msra.mxu0 0
        %503 = vmatprep.subr.bf16.mxu0 0
        %504 = vmatpush1.bf16.msra.mxu0 0
        %505 = vmatprep.mubr.bf16.mxu0 0
        %506 = vmatmul.mubr.bf16.gmra.mrb[0].mxu0 %v401
        %v507 = vpop.f32.mrb[0].mxu0
        %v508 = vadd.f32 0.0, %v507
        %v509 = vpop.f32.mrb[0].mxu0
        %v510 = vpop.f32.mrb[0].mxu0
        %v511 = vadd.f32 0.0, %v510
        %v512 = vpop.f32.mrb[0].mxu0
        %513 = vmatprep.mubr.bf16.mxu0 0
        %514 = vmatmul.mubr.bf16.gmra.mrb[0].mxu0 %v402
        %v515 = vpop.f32.mrb[0].mxu0
        %v516 = vadd.f32 0.0, %v515
        %v517 = vpop.f32.mrb[0].mxu0
        %v518 = vpop.f32.mrb[0].mxu0
        %v519 = vadd.f32 0.0, %v518
        %v520 = vpop.f32.mrb[0].mxu0
        %521 = vmatprep.mubr.bf16.mxu0 0
        %522 = vmatmul.mubr.bf16.gmra.mrb[0].mxu0 %v403
        %v523 = vpop.f32.mrb[0].mxu0
        %v524 = vadd.f32 0.0, %v523
        %v525 = vpop.f32.mrb[0].mxu0
        %v526 = vpop.f32.mrb[0].mxu0
        %v527 = vadd.f32 0.0, %v526
        %v528 = vpop.f32.mrb[0].mxu0
        %529 = vmatprep.mubr.bf16.mxu0 0
        %530 = vmatmul.mubr.bf16.gmra.mrb[0].mxu0 %v404
        %v531 = vpop.f32.mrb[0].mxu0
        %v532 = vadd.f32 0.0, %v531
        %v533 = vpop.f32.mrb[0].mxu0
        %v534 = vpop.f32.mrb[0].mxu0
        %v535 = vadd.f32 0.0, %v534
        %v536 = vpop.f32.mrb[0].mxu0
        %537 = vmatprep.mubr.bf16.mxu0 0
        %538 = vmatmul.mubr.bf16.gmra.mrb[0].mxu0 %v405
        %v539 = vpop.f32.mrb[0].mxu0
        %v540 = vadd.f32 0.0, %v539
        %v541 = vpop.f32.mrb[0].mxu0
        %v542 = vpop.f32.mrb[0].mxu0
        %v543 = vadd.f32 0.0, %v542
        %v544 = vpop.f32.mrb[0].mxu0
        %545 = vmatprep.mubr.bf16.mxu0 0
        %546 = vmatmul.mubr.bf16.gmra.mrb[0].mxu0 %v406
        %v547 = vpop.f32.mrb[0].mxu0
        %v548 = vadd.f32 0.0, %v547
        %v549 = vpop.f32.mrb[0].mxu0
        %v550 = vpop.f32.mrb[0].mxu0
        %v551 = vadd.f32 0.0, %v550
        %v552 = vpop.f32.mrb[0].mxu0
        %553 = vmatprep.mubr.bf16.mxu0 0
        %554 = vmatmul.mubr.bf16.gmra.mrb[0].mxu0 %v407
        %v555 = vpop.f32.mrb[0].mxu0
        %v556 = vadd.f32 0.0, %v555
        %v557 = vpop.f32.mrb[0].mxu0
        %v558 = vpop.f32.mrb[0].mxu0
        %v559 = vadd.f32 0.0, %v558
        %v560 = vpop.f32.mrb[0].mxu0
        %561 = vmatprep.mubr.bf16.mxu0 0
        %562 = vmatmul.mubr.bf16.gmra.mrb[0].mxu0 %v408
        %v563 = vpop.f32.mrb[0].mxu0
        %v564 = vadd.f32 0.0, %v563
        %v565 = vpop.f32.mrb[0].mxu0
        %v566 = vpop.f32.mrb[0].mxu0
        %v567 = vadd.f32 0.0, %v566
        %v568 = vpop.f32.mrb[0].mxu0
        %569 = vdwg.mxu0
        %v570 = vadd.f32 %v381, %v508
        %v571 = vadd.f32 %v382, %v511
        %v572 = vadd.f32 %v383, %v516
        %v573 = vadd.f32 %v384, %v519
        %v574 = vadd.f32 %v385, %v524
        %v575 = vadd.f32 %v386, %v527
        %v576 = vadd.f32 %v387, %v532
        %v577 = vadd.f32 %v388, %v535
        %v578 = vadd.f32 %v389, %v540
        %v579 = vadd.f32 %v390, %v543
        %v580 = vadd.f32 %v391, %v548
        %v581 = vadd.f32 %v392, %v551
        %v582 = vadd.f32 %v393, %v556
        %v583 = vadd.f32 %v394, %v559
        %v584 = vadd.f32 %v395, %v564
        %v585 = vadd.f32 %v396, %v567
        %vm586 = vcmask 261120
        %587 = vst.msk [vmem:[#allocation2] sm:$0xff] %vm586, %v570
        %588 = vst.msk [vmem:[#allocation2 + $0x8] sm:$0xff] %vm586, %v571
        %589 = vst.msk [vmem:[#allocation2 + $0x10] sm:$0xff] %vm586, %v572
        %590 = vst.msk [vmem:[#allocation2 + $0x18] sm:$0xff] %vm586, %v573
        %591 = vst.msk [vmem:[#allocation2 + $0x20] sm:$0xff] %vm586, %v574
        %592 = vst.msk [vmem:[#allocation2 + $0x28] sm:$0xff] %vm586, %v575
        %593 = vst.msk [vmem:[#allocation2 + $0x30] sm:$0xff] %vm586, %v576
        %594 = vst.msk [vmem:[#allocation2 + $0x38] sm:$0xff] %vm586, %v577
        %595 = vst.msk [vmem:[#allocation2 + $0x40] sm:$0xff] %vm586, %v578
        %596 = vst.msk [vmem:[#allocation2 + $0x48] sm:$0xff] %vm586, %v579
        %597 = vst.msk [vmem:[#allocation2 + $0x50] sm:$0xff] %vm586, %v580
        %598 = vst.msk [vmem:[#allocation2 + $0x58] sm:$0xff] %vm586, %v581
        %599 = vst.msk [vmem:[#allocation2 + $0x60] sm:$0xff] %vm586, %v582
        %600 = vst.msk [vmem:[#allocation2 + $0x68] sm:$0xff] %vm586, %v583
        %601 = vst.msk [vmem:[#allocation2 + $0x70] sm:$0xff] %vm586, %v584
        %602 = vst.msk [vmem:[#allocation2 + $0x78] sm:$0xff] %vm586, %v585
        %p603 = scmp.eq.s32.totalorder %s25, 1
        // Predicated region
        $region87: #{tpu_custom_call.1} parent=77 // pred_check
          %p604 = pneg %p603
        $region88: #{tpu_custom_call.1} parent=77 // pred_check_branch
          %606 = sbr.rel (%p604) target = $region90
        $region89: #{tpu_custom_call.1} parent=77 // pred_region
          %v607 = vld [vmem:[#allocation2] sm:$0xff]
          %v608 = vld [vmem:[#allocation2 + $0x8] sm:$0xff]
          %v609 = vld [vmem:[#allocation2 + $0x10] sm:$0xff]
          %v610 = vld [vmem:[#allocation2 + $0x18] sm:$0xff]
          %v611 = vld [vmem:[#allocation2 + $0x20] sm:$0xff]
          %v612 = vld [vmem:[#allocation2 + $0x28] sm:$0xff]
          %v613 = vld [vmem:[#allocation2 + $0x30] sm:$0xff]
          %v614 = vld [vmem:[#allocation2 + $0x38] sm:$0xff]
          %v615 = vld [vmem:[#allocation2 + $0x40] sm:$0xff]
          %v616 = vld [vmem:[#allocation2 + $0x48] sm:$0xff]
          %v617 = vld [vmem:[#allocation2 + $0x50] sm:$0xff]
          %v618 = vld [vmem:[#allocation2 + $0x58] sm:$0xff]
          %v619 = vld [vmem:[#allocation2 + $0x60] sm:$0xff]
          %v620 = vld [vmem:[#allocation2 + $0x68] sm:$0xff]
          %v621 = vld [vmem:[#allocation2 + $0x70] sm:$0xff]
          %v622 = vld [vmem:[#allocation2 + $0x78] sm:$0xff]
          %v623 = vpack.c.bf16 %v608, %v607
          %v624 = vpack.c.bf16 %v610, %v609
          %v625 = vpack.c.bf16 %v612, %v611
          %v626 = vpack.c.bf16 %v614, %v613
          %v627 = vpack.c.bf16 %v616, %v615
          %v628 = vpack.c.bf16 %v618, %v617
          %v629 = vpack.c.bf16 %v620, %v619
          %v630 = vpack.c.bf16 %v622, %v621
          %v631 = vld [vmem:[%s3] sm:$0xf]
          %v632 = vld [vmem:[%s3 + $0x4] sm:$0xf]
          %v633 = vld [vmem:[%s3 + $0x8] sm:$0xf]
          %v634 = vld [vmem:[%s3 + $0xc] sm:$0xf]
          %v635 = vld [vmem:[%s356] sm:$0xf]
          %v636 = vld [vmem:[%s356 + $0x4] sm:$0xf]
          %v637 = vld [vmem:[%s356 + $0x8] sm:$0xf]
          %v638 = vld [vmem:[%s356 + $0xc] sm:$0xf]
          %v639 = vld [vmem:[%s356 + $0x10] sm:$0xf]
          %v640 = vld [vmem:[%s356 + $0x14] sm:$0xf]
          %v641 = vld [vmem:[%s356 + $0x18] sm:$0xf]
          %v642 = vld [vmem:[%s356 + $0x1c] sm:$0xf]
          %v643 = vld [vmem:[%s356 + $0x20] sm:$0xf]
          %v644 = vld [vmem:[%s356 + $0x24] sm:$0xf]
          %v645 = vld [vmem:[%s356 + $0x28] sm:$0xf]
          %v646 = vld [vmem:[%s356 + $0x2c] sm:$0xf]
          %v647 = vld [vmem:[%s356 + $0x30] sm:$0xf]
          %v648 = vld [vmem:[%s356 + $0x34] sm:$0xf]
          %v649 = vld [vmem:[%s356 + $0x38] sm:$0xf]
          %v650 = vld [vmem:[%s356 + $0x3c] sm:$0xf]
          %v651 = vld [vmem:[%s4] sm:$0xf]
          %v652 = vld [vmem:[%s4 + $0x4] sm:$0xf]
          %v653 = vld [vmem:[%s4 + $0x8] sm:$0xf]
          %v654 = vld [vmem:[%s4 + $0xc] sm:$0xf]
          %v671 = vunpack.c.l.b16 %v635
          %v672 = vunpack.c.l.b16 %v636
          %v673 = vunpack.c.l.b16 %v637
          %v674 = vunpack.c.l.b16 %v638
          %v675 = vunpack.c.l.b16 %v639
          %v676 = vunpack.c.l.b16 %v640
          %v677 = vunpack.c.l.b16 %v641
          %v678 = vunpack.c.l.b16 %v642
          %v679 = vunpack.c.l.b16 %v643
          %v680 = vunpack.c.l.b16 %v644
          %v681 = vunpack.c.l.b16 %v645
          %v682 = vunpack.c.l.b16 %v646
          %v683 = vunpack.c.l.b16 %v647
          %v684 = vunpack.c.l.b16 %v648
          %v685 = vunpack.c.l.b16 %v649
          %v686 = vunpack.c.l.b16 %v650
          %v687 = vpack.c.b16 %v672, %v671
          %v688 = vpack.c.b16 %v674, %v673
          %v689 = vpack.c.b16 %v676, %v675
          %v690 = vpack.c.b16 %v678, %v677
          %v691 = vpack.c.b16 %v680, %v679
          %v692 = vpack.c.b16 %v682, %v681
          %v693 = vpack.c.b16 %v684, %v683
          %v694 = vpack.c.b16 %v686, %v685
          %v699 = vunpack.c.l.b16 %v651
          %v700 = vunpack.c.l.b16 %v652
          %v701 = vunpack.c.l.b16 %v653
          %v702 = vunpack.c.l.b16 %v654
          %v703 = vpack.c.b16 %v700, %v699
          %v704 = vpack.c.b16 %v702, %v701
          %v708 = vsel %vm586, %v687, 0
          %v711 = vsel %vm586, %v688, 0
          %v714 = vsel %vm586, %v689, 0
          %v717 = vsel %vm586, %v690, 0
          %v720 = vsel %vm586, %v691, 0
          %v723 = vsel %vm586, %v692, 0
          %v726 = vsel %vm586, %v693, 0
          %v729 = vsel %vm586, %v694, 0
          %731 = vmatprep.subr.bf16.mxu0 0
          %732 = vmatpush1.bf16.msra.mxu0 %v703
          %733 = vmatprep.subr.bf16.mxu0 0
          %734 = vmatpush1.bf16.msra.mxu0 %v704
          %735 = vmatprep.subr.bf16.mxu0 0
          %736 = vmatpush1.bf16.msra.mxu0 0
          %737 = vmatprep.subr.bf16.mxu0 0
          %738 = vmatpush1.bf16.msra.mxu0 0
          %739 = vmatprep.subr.bf16.mxu0 0
          %740 = vmatpush1.bf16.msra.mxu0 0
          %741 = vmatprep.subr.bf16.mxu0 0
          %742 = vmatpush1.bf16.msra.mxu0 0
          %743 = vmatprep.subr.bf16.mxu0 0
          %744 = vmatpush1.bf16.msra.mxu0 0
          %745 = vmatprep.subr.bf16.mxu0 0
          %746 = vmatpush1.bf16.msra.mxu0 0
          %747 = vmatprep.subr.bf16.mxu0 0
          %748 = vmatpush1.bf16.msra.mxu0 0
          %749 = vmatprep.subr.bf16.mxu0 0
          %750 = vmatpush1.bf16.msra.mxu0 0
          %751 = vmatprep.subr.bf16.mxu0 0
          %752 = vmatpush1.bf16.msra.mxu0 0
          %753 = vmatprep.subr.bf16.mxu0 0
          %754 = vmatpush1.bf16.msra.mxu0 0
          %755 = vmatprep.subr.bf16.mxu0 0
          %756 = vmatpush1.bf16.msra.mxu0 0
          %757 = vmatprep.subr.bf16.mxu0 0
          %758 = vmatpush1.bf16.msra.mxu0 0
          %759 = vmatprep.subr.bf16.mxu0 0
          %760 = vmatpush1.bf16.msra.mxu0 0
          %761 = vmatprep.subr.bf16.mxu0 0
          %762 = vmatpush1.bf16.msra.mxu0 0
          %763 = vmatprep.mubr.bf16.mxu0 0
          %764 = vmatmul.mubr.bf16.gmra.mrb[0].mxu0 %v708
          %v765 = vpop.f32.mrb[0].mxu0
          %v766 = vadd.f32 0.0, %v765
          %v767 = vpop.f32.mrb[0].mxu0
          %v768 = vpop.f32.mrb[0].mxu0
          %v769 = vadd.f32 0.0, %v768
          %v770 = vpop.f32.mrb[0].mxu0
          %771 = vmatprep.mubr.bf16.mxu0 0
          %772 = vmatmul.mubr.bf16.gmra.mrb[0].mxu0 %v711
          %v773 = vpop.f32.mrb[0].mxu0
          %v774 = vadd.f32 0.0, %v773
          %v775 = vpop.f32.mrb[0].mxu0
          %v776 = vpop.f32.mrb[0].mxu0
          %v777 = vadd.f32 0.0, %v776
          %v778 = vpop.f32.mrb[0].mxu0
          %779 = vmatprep.mubr.bf16.mxu0 0
          %780 = vmatmul.mubr.bf16.gmra.mrb[0].mxu0 %v714
          %v781 = vpop.f32.mrb[0].mxu0
          %v782 = vadd.f32 0.0, %v781
          %v783 = vpop.f32.mrb[0].mxu0
          %v784 = vpop.f32.mrb[0].mxu0
          %v785 = vadd.f32 0.0, %v784
          %v786 = vpop.f32.mrb[0].mxu0
          %787 = vmatprep.mubr.bf16.mxu0 0
          %788 = vmatmul.mubr.bf16.gmra.mrb[0].mxu0 %v717
          %v789 = vpop.f32.mrb[0].mxu0
          %v790 = vadd.f32 0.0, %v789
          %v791 = vpop.f32.mrb[0].mxu0
          %v792 = vpop.f32.mrb[0].mxu0
          %v793 = vadd.f32 0.0, %v792
          %v794 = vpop.f32.mrb[0].mxu0
          %795 = vmatprep.mubr.bf16.mxu0 0
          %796 = vmatmul.mubr.bf16.gmra.mrb[0].mxu0 %v720
          %v797 = vpop.f32.mrb[0].mxu0
          %v798 = vadd.f32 0.0, %v797
          %v799 = vpop.f32.mrb[0].mxu0
          %v800 = vpop.f32.mrb[0].mxu0
          %v801 = vadd.f32 0.0, %v800
          %v802 = vpop.f32.mrb[0].mxu0
          %803 = vmatprep.mubr.bf16.mxu0 0
          %804 = vmatmul.mubr.bf16.gmra.mrb[0].mxu0 %v723
          %v805 = vpop.f32.mrb[0].mxu0
          %v806 = vadd.f32 0.0, %v805
          %v807 = vpop.f32.mrb[0].mxu0
          %v808 = vpop.f32.mrb[0].mxu0
          %v809 = vadd.f32 0.0, %v808
          %v810 = vpop.f32.mrb[0].mxu0
          %811 = vmatprep.mubr.bf16.mxu0 0
          %812 = vmatmul.mubr.bf16.gmra.mrb[0].mxu0 %v726
          %v813 = vpop.f32.mrb[0].mxu0
          %v814 = vadd.f32 0.0, %v813
          %v815 = vpop.f32.mrb[0].mxu0
          %v816 = vpop.f32.mrb[0].mxu0
          %v817 = vadd.f32 0.0, %v816
          %v818 = vpop.f32.mrb[0].mxu0
          %819 = vmatprep.mubr.bf16.mxu0 0
          %820 = vmatmul.mubr.bf16.gmra.mrb[0].mxu0 %v729
          %v821 = vpop.f32.mrb[0].mxu0
          %v822 = vadd.f32 0.0, %v821
          %v823 = vpop.f32.mrb[0].mxu0
          %v824 = vpop.f32.mrb[0].mxu0
          %v825 = vadd.f32 0.0, %v824
          %v826 = vpop.f32.mrb[0].mxu0
          %827 = vdwg.mxu0
          %v832 = vunpack.c.l.b16 %v631
          %v833 = vunpack.c.l.b16 %v632
          %v834 = vunpack.c.l.b16 %v633
          %v835 = vunpack.c.l.b16 %v634
          %v836 = vpack.c.b16 %v833, %v832
          %v837 = vpack.c.b16 %v835, %v834
          %v841 = vsel %vm586, %v623, 0
          %v844 = vsel %vm586, %v624, 0
          %v847 = vsel %vm586, %v625, 0
          %v850 = vsel %vm586, %v626, 0
          %v853 = vsel %vm586, %v627, 0
          %v856 = vsel %vm586, %v628, 0
          %v859 = vsel %vm586, %v629, 0
          %v862 = vsel %vm586, %v630, 0
          %864 = vmatprep.subr.bf16.mxu0 0
          %865 = vmatpush1.bf16.msra.mxu0 %v836
          %866 = vmatprep.subr.bf16.mxu0 0
          %867 = vmatpush1.bf16.msra.mxu0 %v837
          %868 = vmatprep.subr.bf16.mxu0 0
          %869 = vmatpush1.bf16.msra.mxu0 0
          %870 = vmatprep.subr.bf16.mxu0 0
          %871 = vmatpush1.bf16.msra.mxu0 0
          %872 = vmatprep.subr.bf16.mxu0 0
          %873 = vmatpush1.bf16.msra.mxu0 0
          %874 = vmatprep.subr.bf16.mxu0 0
          %875 = vmatpush1.bf16.msra.mxu0 0
          %876 = vmatprep.subr.bf16.mxu0 0
          %877 = vmatpush1.bf16.msra.mxu0 0
          %878 = vmatprep.subr.bf16.mxu0 0
          %879 = vmatpush1.bf16.msra.mxu0 0
          %880 = vmatprep.subr.bf16.mxu0 0
          %881 = vmatpush1.bf16.msra.mxu0 0
          %882 = vmatprep.subr.bf16.mxu0 0
          %883 = vmatpush1.bf16.msra.mxu0 0
          %884 = vmatprep.subr.bf16.mxu0 0
          %885 = vmatpush1.bf16.msra.mxu0 0
          %886 = vmatprep.subr.bf16.mxu0 0
          %887 = vmatpush1.bf16.msra.mxu0 0
          %888 = vmatprep.subr.bf16.mxu0 0
          %889 = vmatpush1.bf16.msra.mxu0 0
          %890 = vmatprep.subr.bf16.mxu0 0
          %891 = vmatpush1.bf16.msra.mxu0 0
          %892 = vmatprep.subr.bf16.mxu0 0
          %893 = vmatpush1.bf16.msra.mxu0 0
          %894 = vmatprep.subr.bf16.mxu0 0
          %895 = vmatpush1.bf16.msra.mxu0 0
          %896 = vmatprep.mubr.bf16.mxu0 0
          %897 = vmatmul.mubr.bf16.gmra.mrb[0].mxu0 %v841
          %v898 = vpop.f32.mrb[0].mxu0
          %v899 = vadd.f32 %v766, %v898
          %v900 = vpop.f32.mrb[0].mxu0
          %v901 = vpop.f32.mrb[0].mxu0
          %v902 = vadd.f32 %v769, %v901
          %v903 = vpop.f32.mrb[0].mxu0
          %904 = vmatprep.mubr.bf16.mxu0 0
          %905 = vmatmul.mubr.bf16.gmra.mrb[0].mxu0 %v844
          %v906 = vpop.f32.mrb[0].mxu0
          %v907 = vadd.f32 %v774, %v906
          %v908 = vpop.f32.mrb[0].mxu0
          %v909 = vpop.f32.mrb[0].mxu0
          %v910 = vadd.f32 %v777, %v909
          %v911 = vpop.f32.mrb[0].mxu0
          %912 = vmatprep.mubr.bf16.mxu0 0
          %913 = vmatmul.mubr.bf16.gmra.mrb[0].mxu0 %v847
          %v914 = vpop.f32.mrb[0].mxu0
          %v915 = vadd.f32 %v782, %v914
          %v916 = vpop.f32.mrb[0].mxu0
          %v917 = vpop.f32.mrb[0].mxu0
          %v918 = vadd.f32 %v785, %v917
          %v919 = vpop.f32.mrb[0].mxu0
          %920 = vmatprep.mubr.bf16.mxu0 0
          %921 = vmatmul.mubr.bf16.gmra.mrb[0].mxu0 %v850
          %v922 = vpop.f32.mrb[0].mxu0
          %v923 = vadd.f32 %v790, %v922
          %v924 = vpop.f32.mrb[0].mxu0
          %v925 = vpop.f32.mrb[0].mxu0
          %v926 = vadd.f32 %v793, %v925
          %v927 = vpop.f32.mrb[0].mxu0
          %928 = vmatprep.mubr.bf16.mxu0 0
          %929 = vmatmul.mubr.bf16.gmra.mrb[0].mxu0 %v853
          %v930 = vpop.f32.mrb[0].mxu0
          %v931 = vadd.f32 %v798, %v930
          %v932 = vpop.f32.mrb[0].mxu0
          %v933 = vpop.f32.mrb[0].mxu0
          %v934 = vadd.f32 %v801, %v933
          %v935 = vpop.f32.mrb[0].mxu0
          %936 = vmatprep.mubr.bf16.mxu0 0
          %937 = vmatmul.mubr.bf16.gmra.mrb[0].mxu0 %v856
          %v938 = vpop.f32.mrb[0].mxu0
          %v939 = vadd.f32 %v806, %v938
          %v940 = vpop.f32.mrb[0].mxu0
          %v941 = vpop.f32.mrb[0].mxu0
          %v942 = vadd.f32 %v809, %v941
          %v943 = vpop.f32.mrb[0].mxu0
          %944 = vmatprep.mubr.bf16.mxu0 0
          %945 = vmatmul.mubr.bf16.gmra.mrb[0].mxu0 %v859
          %v946 = vpop.f32.mrb[0].mxu0
          %v947 = vadd.f32 %v814, %v946
          %v948 = vpop.f32.mrb[0].mxu0
          %v949 = vpop.f32.mrb[0].mxu0
          %v950 = vadd.f32 %v817, %v949
          %v951 = vpop.f32.mrb[0].mxu0
          %952 = vmatprep.mubr.bf16.mxu0 0
          %953 = vmatmul.mubr.bf16.gmra.mrb[0].mxu0 %v862
          %v954 = vpop.f32.mrb[0].mxu0
          %v955 = vadd.f32 %v822, %v954
          %v956 = vpop.f32.mrb[0].mxu0
          %v957 = vpop.f32.mrb[0].mxu0
          %v958 = vadd.f32 %v825, %v957
          %v959 = vpop.f32.mrb[0].mxu0
          %960 = vdwg.mxu0
          %v961 = vld [vmem:[%s5] sm:$0x1]
          %v963 = vlaneseq
          %v964 = vshrl.u32 %v963, 7
          %v965 = vsub.s32 0, %v964
          %v966 = vrot.slane %v961, %v965
          %v968 = vadd.f32 %v899, %v966
          %v969 = vadd.f32 %v902, %v966
          %v970 = vadd.f32 %v907, %v966
          %v971 = vadd.f32 %v910, %v966
          %v972 = vadd.f32 %v915, %v966
          %v973 = vadd.f32 %v918, %v966
          %v974 = vadd.f32 %v923, %v966
          %v975 = vadd.f32 %v926, %v966
          %v976 = vadd.f32 %v931, %v966
          %v977 = vadd.f32 %v934, %v966
          %v978 = vadd.f32 %v939, %v966
          %v979 = vadd.f32 %v942, %v966
          %v980 = vadd.f32 %v947, %v966
          %v981 = vadd.f32 %v950, %v966
          %v982 = vadd.f32 %v955, %v966
          %v983 = vadd.f32 %v958, %v966
          %v984 = vmax.f32 %v968, 0.0
          %v985 = vmax.f32 %v969, 0.0
          %v986 = vmax.f32 %v970, 0.0
          %v987 = vmax.f32 %v971, 0.0
          %v988 = vmax.f32 %v972, 0.0
          %v989 = vmax.f32 %v973, 0.0
          %v990 = vmax.f32 %v974, 0.0
          %v991 = vmax.f32 %v975, 0.0
          %v992 = vmax.f32 %v976, 0.0
          %v993 = vmax.f32 %v977, 0.0
          %v994 = vmax.f32 %v978, 0.0
          %v995 = vmax.f32 %v979, 0.0
          %v996 = vmax.f32 %v980, 0.0
          %v997 = vmax.f32 %v981, 0.0
          %v998 = vmax.f32 %v982, 0.0
          %v999 = vmax.f32 %v983, 0.0
          %v1000 = vpack.c.bf16 %v985, %v984
          %v1001 = vpack.c.bf16 %v987, %v986
          %v1002 = vpack.c.bf16 %v989, %v988
          %v1003 = vpack.c.bf16 %v991, %v990
          %v1004 = vpack.c.bf16 %v993, %v992
          %v1005 = vpack.c.bf16 %v995, %v994
          %v1006 = vpack.c.bf16 %v997, %v996
          %v1007 = vpack.c.bf16 %v999, %v998
          %v1016 = vunpack.c.l.b16 %v1000
          %v1017 = vunpack.c.h.b16 %v1000
          %v1018 = vunpack.c.l.b16 %v1001
          %v1019 = vunpack.c.h.b16 %v1001
          %v1020 = vunpack.c.l.b16 %v1002
          %v1021 = vunpack.c.h.b16 %v1002
          %v1022 = vunpack.c.l.b16 %v1003
          %v1023 = vunpack.c.h.b16 %v1003
          %v1024 = vunpack.c.l.b16 %v1004
          %v1025 = vunpack.c.h.b16 %v1004
          %v1026 = vunpack.c.l.b16 %v1005
          %v1027 = vunpack.c.h.b16 %v1005
          %v1028 = vunpack.c.l.b16 %v1006
          %v1029 = vunpack.c.h.b16 %v1006
          %v1030 = vunpack.c.l.b16 %v1007
          %v1031 = vunpack.c.h.b16 %v1007
          %v1032 = vpack.c.b16 %v1016, %v1016
          %v1033 = vpack.c.b16 %v1017, %v1017
          %v1034 = vpack.c.b16 %v1018, %v1018
          %v1035 = vpack.c.b16 %v1019, %v1019
          %v1036 = vpack.c.b16 %v1020, %v1020
          %v1037 = vpack.c.b16 %v1021, %v1021
          %v1038 = vpack.c.b16 %v1022, %v1022
          %v1039 = vpack.c.b16 %v1023, %v1023
          %v1040 = vpack.c.b16 %v1024, %v1024
          %v1041 = vpack.c.b16 %v1025, %v1025
          %v1042 = vpack.c.b16 %v1026, %v1026
          %v1043 = vpack.c.b16 %v1027, %v1027
          %v1044 = vpack.c.b16 %v1028, %v1028
          %v1045 = vpack.c.b16 %v1029, %v1029
          %v1046 = vpack.c.b16 %v1030, %v1030
          %v1047 = vpack.c.b16 %v1031, %v1031
          %1064 = vst [vmem:[%s344] sm:$0xf] %v1032
          %1065 = vst [vmem:[%s344 + $0x4] sm:$0xf] %v1033
          %1066 = vst [vmem:[%s344 + $0x8] sm:$0xf] %v1034
          %1067 = vst [vmem:[%s344 + $0xc] sm:$0xf] %v1035
          %1068 = vst [vmem:[%s344 + $0x10] sm:$0xf] %v1036
          %1069 = vst [vmem:[%s344 + $0x14] sm:$0xf] %v1037
          %1070 = vst [vmem:[%s344 + $0x18] sm:$0xf] %v1038
          %1071 = vst [vmem:[%s344 + $0x1c] sm:$0xf] %v1039
          %1072 = vst [vmem:[%s344 + $0x20] sm:$0xf] %v1040
          %1073 = vst [vmem:[%s344 + $0x24] sm:$0xf] %v1041
          %1074 = vst [vmem:[%s344 + $0x28] sm:$0xf] %v1042
          %1075 = vst [vmem:[%s344 + $0x2c] sm:$0xf] %v1043
          %1076 = vst [vmem:[%s344 + $0x30] sm:$0xf] %v1044
          %1077 = vst [vmem:[%s344 + $0x34] sm:$0xf] %v1045
          %1078 = vst [vmem:[%s344 + $0x38] sm:$0xf] %v1046
          %1079 = vst [vmem:[%s344 + $0x3c] sm:$0xf] %v1047
        $region90: #{tpu_custom_call.1} parent=77 // pred_fallthru
          _
        %s1080 = sand.u32 %s183, 1
        %s1081 = scalar_lea.sflag [#allocation5], %s1080
        %s1082 = sand.u32 %s183, 1
        %s1083 = smul.addr %s1082, 64
        %s1084 = scalar_lea.vmem [#allocation4], %s1083
        // Predicated region
        $region91: #{tpu_custom_call.1} parent=77 // pred_check
          %p1085 = pneg %p193
        $region92: #{tpu_custom_call.1} parent=77 // pred_check_branch
          %1087 = sbr.rel (%p1085) target = $region94
        $region93: #{tpu_custom_call.1} parent=77 // pred_region
          %s1088 = smul.u32 16, %s24
          %s1090 = ssub.s32 1024, 1024
          %1091 = vsyncadd %s1081, %s1090
          %s1092 = smul.addr %s1088, 64
          %s1093 = scalar_lea.hbm %s6, %s1092
          %s1094 = sshll.u32 %s1084, 4
          %s1095 = int_to_ptr.vmem [resolvable:$true] %s1094
          %1100 = dma.vmem_to_hbm [thread:$0]  %s1095, 1024, %s1093, %s1081, 64, 64, 4
        $region94: #{tpu_custom_call.1} parent=77 // pred_fallthru
          _
      $region78: #{tpu_custom_call.1} parent=5 // pred_fallthru
        _
      %p1101 = scmp.le.s32.totalorder 2, %s15
      // Predicated region
      $region95: #{tpu_custom_call.1} parent=5 // pred_check
        %p1102 = pneg %p1101
      $region96: #{tpu_custom_call.1} parent=5 // pred_check_branch
        %1104 = sbr.rel (%p1102) target = $region98
      $region97: #{tpu_custom_call.1} parent=5 // pred_region
        %s1105 = ssub.s32 %s15, 2
        // Predicated region
        $region99: #{tpu_custom_call.1} parent=97 // pred_check
          %p1106 = pneg %p199
        $region100: #{tpu_custom_call.1} parent=97 // pred_check_branch
          %1108 = sbr.rel (%p1106) target = $region102
        $region101: #{tpu_custom_call.1} parent=97 // pred_region
          %s1109 = sand.u32 %s184, 1
          %s1110 = scalar_lea.sflag [#allocation5], %s1109
          %s1111 = sand.u32 %s184, 1
          %s1112 = smul.addr %s1111, 64
          %s1113 = scalar_lea.vmem [#allocation4], %s1112
          %1114 = dma.done %s1110, 1024
        $region102: #{tpu_custom_call.1} parent=97 // pred_fallthru
          _
      $region98: #{tpu_custom_call.1} parent=5 // pred_fallthru
        _
    $region6: #{tpu_custom_call.1} parent=1 // loop_footer
      %s19 = sadd.s32 1, %s15
    $region7: #{tpu_custom_call.1} parent=1 // loop_footer_branch
      %14 = sbr.rel target = $region3
    $region8: #{tpu_custom_call.1} parent=1 // loop_exit
      _
    %1115 = vsyncpa [#allocation5], 1
    %s1116 = scalar_lea.sflag [#allocation5], 1
    %1117 = vsyncpa %s1116, 1

</llo_original>
